<compile_context>
chip_gen: v7x
topology: tpu7x:2x2x1
jax: 0.10.0
libtpu: 0.0.40
codegen_flags: <defaults>
</compile_context>

<pallas_src>
import jax
import jax.numpy as jnp
from jax.experimental import pallas as pl
from jax.experimental.pallas import tpu as pltpu

_LANE = 128      # vreg lane width
_SUBLANE = 8     # f32 sublane count


def _round_up(x, m):
    return ((x + m - 1) // m) * m


def aad_classifier_kernel(x_ref, w_ref, b_ref, o_ref):
    # x_ref: (TB, D)  w_ref: (D, OP)  b_ref: (1, OP)  o_ref: (TB, OP)
    y = jnp.dot(x_ref[...], w_ref[...], preferred_element_type=jnp.float32)
    o_ref[...] = (y + b_ref[...]).astype(o_ref.dtype)


def pad_aad_params(weight, bias):
    """Pad classifier params to a lane-dense (multiple-of-128) output dim.

    Do this ONCE at parameter init / model load, not per forward call.

    weight: [D, O] (pre-transposed nn.Linear weight, W_torch.T)
    bias:   [O]
    returns (w_pad [D, O_pad], b_pad [1, O_pad], O)
    """
    D, O = weight.shape
    O_pad = _round_up(max(O, 1), _LANE)
    w_pad = weight
    b_pad = bias.reshape(1, O)
    if O_pad != O:
        w_pad = jnp.pad(w_pad, ((0, 0), (0, O_pad - O)))
        b_pad = jnp.pad(b_pad, ((0, 0), (0, O_pad - O)))
    return w_pad, b_pad, O


def _select_tile_b(B):
    if B <= 256:
        # Single grid step; block equals the full batch dim, so no (8,)
        # divisibility constraint and no padding needed.
        return B
    if B <= 2048:
        # At least 2 grid steps so both v7x TensorCores ("parallel" axis is
        # sharded across cores) get work; ~one extra 0.35us step on v5e/v6e.
        return _round_up(-(-B // 2), _SUBLANE)
    # Large B: 1024-row tiles hit ~85% of HBM roofline; ~2.2 MiB VMEM
    # double-buffered, well inside even v5e's 16 MiB scoped default.
    return 1024


def aad_forward(text_embeddings, w_pad, b_pad, out_dim, *,
                use_pallas=None, return_padded=False):
    """Pallas implementation of AAD.forward (classifier only).

    text_embeddings: [B, D] float32
    w_pad:           [D, O_pad] float32, O_pad % 128 == 0 (see pad_aad_params)
    b_pad:           [1, O_pad] float32
    out_dim:         true output dim O (3 for num_labels=3)
    returns:         [B, O] (or [B, O_pad] if return_padded=True)
    """
    B, D = text_embeddings.shape
    O_pad = w_pad.shape[1]
    assert O_pad % _LANE == 0 and b_pad.shape == (1, O_pad)

    if B == 0:
        return jnp.zeros((0, O_pad if return_padded else out_dim),
                         dtype=text_embeddings.dtype)

    if use_pallas is None:
        # Tiny batches: pallas_call custom-call overhead dominates; let XLA's
        # fused GEMM+bias handle it.
        use_pallas = B >= 256

    if not use_pallas:
        out = text_embeddings @ w_pad + b_pad
    else:
        tile_b = _select_tile_b(B)
        grid = (pl.cdiv(B, tile_b),)

        out = pl.pallas_call(
            aad_classifier_kernel,
            out_shape=jax.ShapeDtypeStruct((B, O_pad), text_embeddings.dtype),
            grid=grid,
            in_specs=[
                pl.BlockSpec((tile_b, D), lambda i: (i, 0)),   # x tile (ragged edge OK)
                pl.BlockSpec((D, O_pad), lambda i: (0, 0)),    # full padded weight
                pl.BlockSpec((1, O_pad), lambda i: (0, 0)),    # bias (broadcast)
            ],
            out_specs=pl.BlockSpec((tile_b, O_pad), lambda i: (i, 0)),
            compiler_params=pltpu.CompilerParams(
                dimension_semantics=("parallel",)
            ),
        )(text_embeddings, w_pad, b_pad)

    if return_padded:
        return out
    return out[:, :out_dim]


if __name__ == "__main__":
    # Module hyper-params (small, consistent with AAD's __init__):
    #   text_input_dim = 128, num_labels = 3 -> output_dim = 3
    D = 128
    num_labels = 3
    O = 1 if num_labels == 2 else num_labels

    key = jax.random.PRNGKey(0)
    kx, kw, kb, kx2 = jax.random.split(key, 4)

    # Deterministic synthetic parameters (not loaded from a checkpoint);
    # lane-pad them ONCE, outside the forward path.
    weight = jax.random.normal(kw, (D, O), dtype=jnp.float32) * 0.02
    bias = jax.random.normal(kb, (O,), dtype=jnp.float32) * 0.02
    w_pad, b_pad, out_dim = pad_aad_params(weight, bias)

    # TODO(synk): src_encoder / tgt_encoder / discriminator are constructed in
    # __init__ but never used in forward; intentionally omitted here.

    # --- headline small shape: force the Pallas path so the kernel runs ---
    B = 16
    text_embeddings = jax.random.normal(kx, (B, D), dtype=jnp.float32)
    y_pred = aad_forward(text_embeddings, w_pad, b_pad, out_dim,
                         use_pallas=True)
    y_pred = jax.block_until_ready(y_pred)
    y_ref = text_embeddings @ weight + bias
    assert y_pred.shape == (B, O)
    assert jnp.allclose(y_pred, y_ref, atol=1e-5, rtol=1e-5)

    # --- ragged / multi-step path (2 grid steps, partial last block) ---
    B2 = 300
    x2 = jax.random.normal(kx2, (B2, D), dtype=jnp.float32)
    y2 = aad_forward(x2, w_pad, b_pad, out_dim, use_pallas=True)
    y2 = jax.block_until_ready(y2)
    y2_ref = x2 @ weight + bias
    assert y2.shape == (B2, O)
    assert jnp.allclose(y2, y2_ref, atol=1e-5, rtol=1e-5)

    print("KERNEL_OK")
</pallas_src>

<mosaic_0001>
module attributes {stable_mosaic.version = 11 : i64} {
  func.func @aad_classifier_kernel(%arg0: i32, %arg1: memref<16x128xf32, #tpu.memory_space<vmem>>, %arg2: memref<128x128xf32, #tpu.memory_space<vmem>>, %arg3: memref<1x128xf32, #tpu.memory_space<vmem>>, %arg4: memref<16x128xf32, #tpu.memory_space<vmem>>) attributes {dimension_semantics = [#tpu.dimension_semantics<parallel>], iteration_bounds = array<i64: 1>, scalar_prefetch = 0 : i64, scratch_operands = 0 : i64, tpu.core_type = #tpu.core_type<tc>, window_params = [{transform_indices = @transform_0, window_bounds = array<i64: 16, 128>}, {pipeline_mode = #tpu.pipeline_mode<synchronous>, transform_indices = @transform_1, window_bounds = array<i64: 128, 128>}, {pipeline_mode = #tpu.pipeline_mode<synchronous>, transform_indices = @transform_2, window_bounds = array<i64: 1, 128>}, {transform_indices = @transform_3, window_bounds = array<i64: 16, 128>}]} {
    %c0 = arith.constant 0 : index
    %c0_0 = arith.constant 0 : index
    %0 = vector.load %arg1[%c0, %c0_0] : memref<16x128xf32, #tpu.memory_space<vmem>>, vector<16x128xf32>
    %c0_1 = arith.constant 0 : index
    %c0_2 = arith.constant 0 : index
    %1 = vector.load %arg2[%c0_1, %c0_2] : memref<128x128xf32, #tpu.memory_space<vmem>>, vector<128x128xf32>
    %cst = arith.constant dense<0.000000e+00> : vector<16x128xf32>
    %2 = tpu.matmul %0, %1, %cst {dimension_numbers = #tpu.dot_dimension_numbers<[1], [0], [0], [1], [0, 0, 1, 1], [], []>} : vector<16x128xf32>, vector<128x128xf32>, vector<16x128xf32> -> vector<16x128xf32>
    %c0_3 = arith.constant 0 : index
    %c0_4 = arith.constant 0 : index
    %3 = vector.load %arg3[%c0_3, %c0_4] : memref<1x128xf32, #tpu.memory_space<vmem>>, vector<1x128xf32>
    %4 = vector.broadcast %3 : vector<1x128xf32> to vector<16x128xf32>
    %5 = arith.addf %2, %4 : vector<16x128xf32>
    %c0_5 = arith.constant 0 : index
    %c0_6 = arith.constant 0 : index
    %6 = vector.load %arg4[%c0_5, %c0_6] : memref<16x128xf32, #tpu.memory_space<vmem>>, vector<16x128xf32>
    tpu.vector_store %arg4[%c0_5, %c0_6], %5 {strides = array<i32>} : memref<16x128xf32, #tpu.memory_space<vmem>>, vector<16x128xf32>,
    return
  }
  func.func @transform_0(%arg0: i32) -> (i32, i32) {
    %c0_i32 = arith.constant 0 : i32
    %c0_i32_0 = arith.constant 0 : i32
    return %arg0, %c0_i32 : i32, i32
  }
  func.func @transform_1(%arg0: i32) -> (i32, i32) {
    %c0_i32 = arith.constant 0 : i32
    %c0_i32_0 = arith.constant 0 : i32
    %c0_i32_1 = arith.constant 0 : i32
    return %c0_i32, %c0_i32_0 : i32, i32
  }
  func.func @transform_2(%arg0: i32) -> (i32, i32) {
    %c0_i32 = arith.constant 0 : i32
    %c0_i32_0 = arith.constant 0 : i32
    %c0_i32_1 = arith.constant 0 : i32
    return %c0_i32, %c0_i32_0 : i32, i32
  }
  func.func @transform_3(%arg0: i32) -> (i32, i32) {
    %c0_i32 = arith.constant 0 : i32
    %c0_i32_0 = arith.constant 0 : i32
    return %arg0, %c0_i32 : i32, i32
  }
}

</mosaic_0001>

<llo_original>
// kernel: tpu_custom_call.1
$region0: #{tpu_custom_call.1}
  #allocation0 [shape = 'u32[]', space=smem, size = 0x4, offset = 0x4, fixed_abs, tag = 'smem constant byte address 0x4 - core index']
  #allocation1 [shape = 'u32[144,128]{1,0:T(1,128)}', space=vmem, size = 0x12000, scoped, tag = 'internal scratch']
  %s0 = inlined_call_operand.hbm [shape: f32[16,128], index: 0, kind: input, shape index: {}]
  %s1 = inlined_call_operand.hbm [shape: f32[128,128], index: 1, kind: input, shape index: {}]
  %s2 = inlined_call_operand.vmem [shape: f32[1,128], index: 2, kind: input, shape index: {}]
  %s3 = inlined_call_operand.hbm [shape: f32[16,128], index: 3, kind: output, shape index: {}]
  %s4 = sld [smem:[#allocation0]]
  $region30: #{tpu_custom_call.1} parent=0
    _
  %s6 = ssub.s32 1, %s4
  %s7 = scalar_select 0, %s6, %s4
  $region1: #{tpu_custom_call.1} parent=0
    #allocation2 [shape = 'u8[8192]{0}', space=vmem, size = 0x2000, scoped, tag = 'input window, operand 0, single buffered']
    #allocation3 [shape = 's32[1]{0}', space=sflag, size = 0x4, scoped, tag = 'scoped memory for tpu_custom_call.1']
    #allocation4 [shape = 's32[1]{0}', space=sflag, size = 0x4, scoped, tag = 'scoped memory for tpu_custom_call.1']
    #allocation5 [shape = 'u8[65536]{0}', space=vmem, size = 0x10000, scoped, tag = 'input window, operand 1, single buffered']
    #allocation6 [shape = 's32[1]{0}', space=sflag, size = 0x4, scoped, tag = 'scoped memory for tpu_custom_call.1']
    #allocation7 [shape = 'u8[8192]{0}', space=vmem, size = 0x2000, scoped, tag = 'output window, operand 0, single buffered']
    %8 = vsyncpa [#allocation3], 0
    %9 = vsyncpa [#allocation6], 0
    %10 = vsyncpa [#allocation4], 0
    // Predicated region
    $region2: #{tpu_custom_call.1} parent=1 // pred_check
      _
    $region3: #{tpu_custom_call.1} parent=1 // pred_check_branch
      %12 = sbr.rel (0) target = $region5
    $region4: #{tpu_custom_call.1} parent=1 // pred_region
      %s14 = ssub.s32 256, 256
      %15 = vsyncadd [#allocation3], %s14
      %s16 = sshll.u32 [#allocation2], 4
      %s17 = int_to_ptr.vmem [resolvable:$true] %s16
      %22 = dma.hbm_to_vmem [thread:$0]  %s0, 256, %s17, [#allocation3], 128, 128, 8
    $region5: #{tpu_custom_call.1} parent=1 // pred_fallthru
      _
    // Predicated region
    $region6: #{tpu_custom_call.1} parent=1 // pred_check
      _
    $region7: #{tpu_custom_call.1} parent=1 // pred_check_branch
      %24 = sbr.rel (0) target = $region9
    $region8: #{tpu_custom_call.1} parent=1 // pred_region
      %s26 = ssub.s32 2048, 2048
      %27 = vsyncadd [#allocation6], %s26
      %s28 = sshll.u32 [#allocation5], 4
      %s29 = int_to_ptr.vmem [resolvable:$true] %s28
      %34 = dma.hbm_to_vmem [thread:$0]  %s1, 2048, %s29, [#allocation6], 128, 128, 8
    $region9: #{tpu_custom_call.1} parent=1 // pred_fallthru
      _
    // Predicated region
    $region10: #{tpu_custom_call.1} parent=1 // pred_check
      _
    $region11: #{tpu_custom_call.1} parent=1 // pred_check_branch
      %36 = sbr.rel (0) target = $region13
    $region12: #{tpu_custom_call.1} parent=1 // pred_region
      _
    $region13: #{tpu_custom_call.1} parent=1 // pred_fallthru
      _
    // Predicated region
    $region14: #{tpu_custom_call.1} parent=1 // pred_check
      _
    $region15: #{tpu_custom_call.1} parent=1 // pred_check_branch
      %38 = sbr.rel (0) target = $region17
    $region16: #{tpu_custom_call.1} parent=1 // pred_region
      %39 = dma.done [#allocation3], 256
    $region17: #{tpu_custom_call.1} parent=1 // pred_fallthru
      _
    // Predicated region
    $region18: #{tpu_custom_call.1} parent=1 // pred_check
      _
    $region19: #{tpu_custom_call.1} parent=1 // pred_check_branch
      %41 = sbr.rel (0) target = $region21
    $region20: #{tpu_custom_call.1} parent=1 // pred_region
      %42 = dma.done [#allocation6], 2048
    $region21: #{tpu_custom_call.1} parent=1 // pred_fallthru
      _
    %v43 = vld [vmem:[#allocation2] sm:$0xff]
    %v44 = vld [vmem:[#allocation2 + $0x8] sm:$0xff]
    %v45 = vld [vmem:[#allocation5] sm:$0xff]
    %v46 = vld [vmem:[#allocation5 + $0x8] sm:$0xff]
    %v47 = vld [vmem:[#allocation5 + $0x10] sm:$0xff]
    %v48 = vld [vmem:[#allocation5 + $0x18] sm:$0xff]
    %v49 = vld [vmem:[#allocation5 + $0x20] sm:$0xff]
    %v50 = vld [vmem:[#allocation5 + $0x28] sm:$0xff]
    %v51 = vld [vmem:[#allocation5 + $0x30] sm:$0xff]
    %v52 = vld [vmem:[#allocation5 + $0x38] sm:$0xff]
    %v53 = vld [vmem:[#allocation5 + $0x40] sm:$0xff]
    %v54 = vld [vmem:[#allocation5 + $0x48] sm:$0xff]
    %v55 = vld [vmem:[#allocation5 + $0x50] sm:$0xff]
    %v56 = vld [vmem:[#allocation5 + $0x58] sm:$0xff]
    %v57 = vld [vmem:[#allocation5 + $0x60] sm:$0xff]
    %v58 = vld [vmem:[#allocation5 + $0x68] sm:$0xff]
    %v59 = vld [vmem:[#allocation5 + $0x70] sm:$0xff]
    %v60 = vld [vmem:[#allocation5 + $0x78] sm:$0xff]
    %v61 = vld [vmem:[%s2] sm:$0x1]
    %v63 = vlaneseq
    %v64 = vshrl.u32 %v63, 7
    %v65 = vsub.s32 0, %v64
    %v66 = vrot.slane %v61, %v65
    %68 = vmatprep.subr.mxu0 0.0
    %69 = vmatpush1.msra.mxu0 %v45
    %70 = vmatprep.subr.mxu0 0.0
    %71 = vmatpush1.msra.mxu0 %v46
    %72 = vmatprep.subr.mxu0 0.0
    %73 = vmatpush1.msra.mxu0 %v47
    %74 = vmatprep.subr.mxu0 0.0
    %75 = vmatpush1.msra.mxu0 %v48
    %76 = vmatprep.subr.mxu0 0.0
    %77 = vmatpush1.msra.mxu0 %v49
    %78 = vmatprep.subr.mxu0 0.0
    %79 = vmatpush1.msra.mxu0 %v50
    %80 = vmatprep.subr.mxu0 0.0
    %81 = vmatpush1.msra.mxu0 %v51
    %82 = vmatprep.subr.mxu0 0.0
    %83 = vmatpush1.msra.mxu0 %v52
    %84 = vmatprep.subr.mxu0 0.0
    %85 = vmatpush1.msra.mxu0 %v53
    %86 = vmatprep.subr.mxu0 0.0
    %87 = vmatpush1.msra.mxu0 %v54
    %88 = vmatprep.subr.mxu0 0.0
    %89 = vmatpush1.msra.mxu0 %v55
    %90 = vmatprep.subr.mxu0 0.0
    %91 = vmatpush1.msra.mxu0 %v56
    %92 = vmatprep.subr.mxu0 0.0
    %93 = vmatpush1.msra.mxu0 %v57
    %94 = vmatprep.subr.mxu0 0.0
    %95 = vmatpush1.msra.mxu0 %v58
    %96 = vmatprep.subr.mxu0 0.0
    %97 = vmatpush1.msra.mxu0 %v59
    %98 = vmatprep.subr.mxu0 0.0
    %99 = vmatpush1.msra.mxu0 %v60
    %100 = vmatprep.subr.mxu0 0.0
    %101 = vmatpush1.msra.mxu0 0.0
    %102 = vmatprep.subr.mxu0 0.0
    %103 = vmatpush1.msra.mxu0 0.0
    %104 = vmatprep.subr.mxu0 0.0
    %105 = vmatpush1.msra.mxu0 0.0
    %106 = vmatprep.subr.mxu0 0.0
    %107 = vmatpush1.msra.mxu0 0.0
    %108 = vmatprep.subr.mxu0 0.0
    %109 = vmatpush1.msra.mxu0 0.0
    %110 = vmatprep.subr.mxu0 0.0
    %111 = vmatpush1.msra.mxu0 0.0
    %112 = vmatprep.subr.mxu0 0.0
    %113 = vmatpush1.msra.mxu0 0.0
    %114 = vmatprep.subr.mxu0 0.0
    %115 = vmatpush1.msra.mxu0 0.0
    %116 = vmatprep.subr.mxu0 0.0
    %117 = vmatpush1.msra.mxu0 0.0
    %118 = vmatprep.subr.mxu0 0.0
    %119 = vmatpush1.msra.mxu0 0.0
    %120 = vmatprep.subr.mxu0 0.0
    %121 = vmatpush1.msra.mxu0 0.0
    %122 = vmatprep.subr.mxu0 0.0
    %123 = vmatpush1.msra.mxu0 0.0
    %124 = vmatprep.subr.mxu0 0.0
    %125 = vmatpush1.msra.mxu0 0.0
    %126 = vmatprep.subr.mxu0 0.0
    %127 = vmatpush1.msra.mxu0 0.0
    %128 = vmatprep.subr.mxu0 0.0
    %129 = vmatpush1.msra.mxu0 0.0
    %130 = vmatprep.subr.mxu0 0.0
    %131 = vmatpush1.msra.mxu0 0.0
    %132 = vmatprep.mubr.f32.mxu0 0.0
    %133 = vmatmul.mubr.f32.gmra.mrb[0].mxu0 %v43
    %v134 = vpop.f32.mrb[0].mxu0
    %v135 = vadd.f32 %v66, %v134
    %v136 = vpop.f32.mrb[0].mxu0
    %137 = vmatprep.mubr.f32.mxu0 0.0
    %138 = vmatmul.mubr.f32.gmra.mrb[0].mxu0 %v44
    %v139 = vpop.f32.mrb[0].mxu0
    %v140 = vadd.f32 %v66, %v139
    %v141 = vpop.f32.mrb[0].mxu0
    %142 = vdwg.mxu0
    %143 = vst [vmem:[#allocation7] sm:$0xff] %v135
    %144 = vst [vmem:[#allocation7 + $0x8] sm:$0xff] %v140
    // Predicated region
    $region22: #{tpu_custom_call.1} parent=1 // pred_check
      _
    $region23: #{tpu_custom_call.1} parent=1 // pred_check_branch
      %146 = sbr.rel (0) target = $region25
    $region24: #{tpu_custom_call.1} parent=1 // pred_region
      %s148 = ssub.s32 256, 256
      %149 = vsyncadd [#allocation4], %s148
      %s150 = sshll.u32 [#allocation7], 4
      %s151 = int_to_ptr.vmem [resolvable:$true] %s150
      %156 = dma.vmem_to_hbm [thread:$0]  %s151, 256, %s3, [#allocation4], 128, 128, 8
    $region25: #{tpu_custom_call.1} parent=1 // pred_fallthru
      _
    // Predicated region
    $region26: #{tpu_custom_call.1} parent=1 // pred_check
      _
    $region27: #{tpu_custom_call.1} parent=1 // pred_check_branch
      %158 = sbr.rel (0) target = $region29
    $region28: #{tpu_custom_call.1} parent=1 // pred_region
      %159 = dma.done [#allocation4], 256
    $region29: #{tpu_custom_call.1} parent=1 // pred_fallthru
      _
    %160 = vsyncpa [#allocation3], 1
    %161 = vsyncpa [#allocation6], 1
    %162 = vsyncpa [#allocation4], 1

</llo_original>
